<compile_context>
chip_gen: v5e
topology: v5e:2x2
jax: 0.10.0
libtpu: 0.0.40
codegen_flags: <defaults>
</compile_context>

<pallas_src>
import math
import functools

import jax
import jax.numpy as jnp
from jax.experimental import pallas as pl
from jax.experimental.pallas import tpu as pltpu

LANE = 128
_EPS = 1e-5
_SLOPE = 0.01  # nn.LeakyReLU default


def _round_up(v, m):
    return (v + m - 1) // m * m


# -----------------------------------------------------------------------------
# Fused kernel factory
# -----------------------------------------------------------------------------
def _make_kernel(num_hidden, z_dim, tile_n, n_actual):
    """kernel(x, (w, gamma, beta)*L, w_fc, b_fc, out, (mean, scale)*L scratch).

    Grid = (num_hidden + 1 phases, N tiles).
      phase l < L : accumulate layer-l batch sum / sumsq (recompute layers < l).
      phase L     : full forward + fc head; out[:, :z) = mu, out[:, z:2z) = exp(logvar).
    """
    inv_n = 1.0 / float(n_actual)

    def kernel(*refs):
        x_ref = refs[0]
        n_in = 1 + 3 * num_hidden + 2
        o_ref = refs[n_in]
        stats = refs[n_in + 1:]                      # (mean, scale) pairs per layer
        w_refs = [refs[1 + 3 * l] for l in range(num_hidden)]
        g_refs = [refs[2 + 3 * l] for l in range(num_hidden)]
        b_refs = [refs[3 + 3 * l] for l in range(num_hidden)]
        wf_ref = refs[1 + 3 * num_hidden]
        bf_ref = refs[2 + 3 * num_hidden]

        p = pl.program_id(0)                          # phase
        i = pl.program_id(1)                          # N tile
        n_tiles = pl.num_programs(1)

        x = x_ref[...]                                # [tile_n, input_dim] f32

        def layer_pre(l, h):
            # Linear (hidden bias dropped: cancelled by train-mode BN mean-sub).
            # bf16 operands at the dot, f32 accumulation on the MXU.
            return jnp.dot(h.astype(jnp.bfloat16), w_refs[l][...],
                           preferred_element_type=jnp.float32)

        def layer_post(l, a):
            mean = stats[2 * l][...]                  # finalised batch mean
            scale = stats[2 * l + 1][...]             # gamma * rsqrt(var + eps)
            hn = (a - mean) * scale + b_refs[l][...]
            return jnp.where(hn >= 0.0, hn, _SLOPE * hn)   # LeakyReLU(0.01), f32

        # Row-validity mask: rows past n_actual (tile padding) are excluded from stats.
        rows = jax.lax.broadcasted_iota(jnp.int32, (tile_n, 1), 0)
        valid = ((rows + i * tile_n) < n_actual).astype(jnp.float32)

        # ---------------- statistics phases ----------------
        for phase in range(num_hidden):
            @pl.when(p == phase)
            def _(phase=phase):
                h = x
                for l in range(phase):                # layers < phase: stats finalised
                    h = layer_post(l, layer_pre(l, h))
                a = layer_pre(phase, h)               # [tile_n, H_pad] f32
                s_sum, s_sq = stats[2 * phase], stats[2 * phase + 1]

                @pl.when(i == 0)
                def _():
                    s_sum[...] = jnp.zeros_like(s_sum)
                    s_sq[...] = jnp.zeros_like(s_sq)

                am = a * valid
                s_sum[...] += jnp.sum(am, axis=0, keepdims=True)
                s_sq[...] += jnp.sum(am * a, axis=0, keepdims=True)

                @pl.when(i == n_tiles - 1)
                def _():
                    mean = s_sum[...] * inv_n
                    var = jnp.maximum(s_sq[...] * inv_n - mean * mean, 0.0)
                    s_sum[...] = mean                                        # -> mean
                    s_sq[...] = g_refs[phase][...] * jax.lax.rsqrt(var + _EPS)  # -> scale

        # ---------------- final phase: full forward + fc head ----------------
        @pl.when(p == num_hidden)
        def _():
            h = x
            for l in range(num_hidden):
                h = layer_post(l, layer_pre(l, h))
            z = jnp.dot(h.astype(jnp.bfloat16), wf_ref[...],
                        preferred_element_type=jnp.float32) + bf_ref[...]
            lane = jax.lax.broadcasted_iota(jnp.int32, z.shape, 1)
            is_logvar = (lane >= z_dim) & (lane < 2 * z_dim)
            # single outer select; exp overflow in unselected lanes is harmless
            o_ref[...] = jnp.where(is_logvar, jnp.exp(z), z)

    return kernel


# -----------------------------------------------------------------------------
# Wrapper
# -----------------------------------------------------------------------------
def svgp_encoder_forward(x, hidden_params, fc_params, z_dim, tile_n=512):
    """x: [N, input_dim] f32.  hidden_params: [(w_bf16, gamma, beta), ...] padded
    to 128 output lanes (see pad_params).  fc_params: (wf_bf16, bf).
    Returns (mu [N, z_dim], var [N, z_dim] = exp(logvar))."""
    n, d = x.shape
    num_hidden = len(hidden_params)

    tile_n = max(8, min(tile_n, _round_up(n, 8)))
    tile_n = _round_up(tile_n, 8)
    n_pad = _round_up(n, tile_n)
    num_tiles = n_pad // tile_n

    x_p = x.astype(jnp.float32)
    if n_pad != n:
        # Row padding only up to one tile; padded rows are masked out of BN stats.
        x_p = jnp.pad(x_p, ((0, n_pad - n), (0, 0)))

    inputs = [x_p]
    in_specs = [pl.BlockSpec((tile_n, d), lambda p, i: (i, 0))]
    for (w, g, b) in hidden_params:
        inputs += [w, g, b]
        in_specs += [pl.BlockSpec(w.shape, lambda p, i: (0, 0)),   # resident weights
                     pl.BlockSpec(g.shape, lambda p, i: (0, 0)),
                     pl.BlockSpec(b.shape, lambda p, i: (0, 0))]
    wf, bf = fc_params
    inputs += [wf, bf]
    in_specs += [pl.BlockSpec(wf.shape, lambda p, i: (0, 0)),
                 pl.BlockSpec(bf.shape, lambda p, i: (0, 0))]
    out_pad = wf.shape[1]

    scratch = []
    for (w, _, _) in hidden_params:
        h_pad = w.shape[1]
        scratch += [pltpu.VMEM((1, h_pad), jnp.float32),   # batch sum -> mean
                    pltpu.VMEM((1, h_pad), jnp.float32)]   # batch sumsq -> scale

    # Advisory cost estimate.
    dims = [d] + [w.shape[1] for (w, _, _) in hidden_params]
    flops = 0
    for ph in range(num_hidden):
        for l in range(ph + 1):
            flops += 2 * n_pad * dims[l] * dims[l + 1]
    for l in range(num_hidden):
        flops += 2 * n_pad * dims[l] * dims[l + 1]
    flops += 2 * n_pad * dims[-1] * out_pad
    bytes_accessed = (int(x_p.size) * 4 * (num_hidden + 1)
                      + sum(int(w.size) * 2 + int(g.size) * 4 + int(b.size) * 4
                            for (w, g, b) in hidden_params)
                      + int(wf.size) * 2 + int(bf.size) * 4
                      + n_pad * out_pad * 4)

    kernel = _make_kernel(num_hidden, z_dim, tile_n, n)

    out = pl.pallas_call(
        kernel,
        out_shape=jax.ShapeDtypeStruct((n_pad, out_pad), jnp.float32),
        grid_spec=pltpu.PrefetchScalarGridSpec(
            num_scalar_prefetch=0,
            grid=(num_hidden + 1, num_tiles),
            in_specs=in_specs,
            out_specs=pl.BlockSpec((tile_n, out_pad), lambda p, i: (i, 0)),
            scratch_shapes=scratch),
        compiler_params=pltpu.CompilerParams(
            # stats accumulate into shared scratch across tiles -> both arbitrary
            dimension_semantics=("arbitrary", "arbitrary"),
            vmem_limit_bytes=32 * 1024 * 1024),
        cost_estimate=pl.CostEstimate(
            flops=flops,
            transcendentals=n_pad * out_pad,
            bytes_accessed=bytes_accessed),
    )(*inputs)

    mu = out[:n, :z_dim]
    var = out[:n, z_dim:2 * z_dim]
    return mu, var


# -----------------------------------------------------------------------------
# Parameter construction (mirrors the PyTorch __init__) + lane padding
# -----------------------------------------------------------------------------
def xavier_uniform(key, fan_in, fan_out):
    bound = math.sqrt(6.0 / (fan_in + fan_out))
    # stored pre-transposed: [in, out] so the kernel does x @ W directly
    return jax.random.uniform(key, (fan_in, fan_out), jnp.float32, -bound, bound)


def make_params(key, input_dim, z_dim, hidden_dims):
    dims = [input_dim] + list(hidden_dims)
    hidden = []
    for i in range(1, len(dims)):
        key, kw, kb = jax.random.split(key, 3)
        w = xavier_uniform(kw, dims[i - 1], dims[i])
        bb = 1.0 / math.sqrt(dims[i - 1])
        b_lin = jax.random.uniform(kb, (1, dims[i]), jnp.float32, -bb, bb)
        gamma = jnp.ones((1, dims[i]), jnp.float32)   # BatchNorm1d weight init
        beta = jnp.zeros((1, dims[i]), jnp.float32)   # BatchNorm1d bias init
        hidden.append((w, b_lin, gamma, beta))
    key, kw, kb = jax.random.split(key, 3)
    wf = xavier_uniform(kw, hidden_dims[-1], 2 * z_dim)
    bb = 1.0 / math.sqrt(hidden_dims[-1])
    bf = jax.random.uniform(kb, (1, 2 * z_dim), jnp.float32, -bb, bb)
    return hidden, (wf, bf)


def pad_params(hidden, fc, input_dim):
    """Zero-pad output (lane) dims to multiples of 128; leave the first
    contraction dim (input_dim) unpadded; cast weights to bf16.  Hidden Linear
    biases are dropped (cancelled exactly by train-mode BN mean subtraction)."""

    def pad2(a, rows, cols):
        return jnp.pad(a, ((0, rows - a.shape[0]), (0, cols - a.shape[1])))

    hp = []
    prev = input_dim
    for (w, _b_lin, g, b) in hidden:
        op = _round_up(w.shape[1], LANE)
        hp.append((pad2(w, prev, op).astype(jnp.bfloat16),
                   pad2(g, 1, op), pad2(b, 1, op)))
        prev = op
    wf, bf = fc
    op = _round_up(wf.shape[1], LANE)
    return hp, (pad2(wf, prev, op).astype(jnp.bfloat16), pad2(bf, 1, op))


# -----------------------------------------------------------------------------
# Pure-JAX reference (unpadded) for correctness checks
# -----------------------------------------------------------------------------
def reference_forward(x, hidden, fc, z_dim, dot_dtype=jnp.float32):
    def dot(a, b):
        return jnp.dot(a.astype(dot_dtype), b.astype(dot_dtype),
                       preferred_element_type=jnp.float32,
                       precision=jax.lax.Precision.HIGHEST)

    h = x
    for (w, b_lin, g, b) in hidden:
        a = dot(h, w) + b_lin
        mean = jnp.mean(a, axis=0, keepdims=True)
        var = jnp.mean((a - mean) ** 2, axis=0, keepdims=True)
        hn = (a - mean) * jax.lax.rsqrt(var + _EPS) * g + b
        h = jnp.where(hn >= 0.0, hn, _SLOPE * hn)
    wf, bf = fc
    z = dot(h, wf) + bf
    return z[:, :z_dim], jnp.exp(z[:, z_dim:])


# -----------------------------------------------------------------------------
if __name__ == "__main__":
    N = 40              # cells / spots (NOT a multiple of tile_n -> exercises masking)
    INPUT_DIM = 16      # gene-expression feature dim
    HIDDEN_DIMS = [32, 32]
    SVGP_Z_DIM = 4
    TILE_N = 16         # small tile so the demo exercises the multi-tile pipeline

    key = jax.random.PRNGKey(0)
    key, kx, kp = jax.random.split(key, 3)
    x = jax.random.normal(kx, (N, INPUT_DIM), jnp.float32)

    hidden, fc = make_params(kp, INPUT_DIM, SVGP_Z_DIM, HIDDEN_DIMS)
    hidden_p, fc_p = pad_params(hidden, fc, INPUT_DIM)

    fwd = jax.jit(functools.partial(svgp_encoder_forward,
                                    z_dim=SVGP_Z_DIM, tile_n=TILE_N))
    mu, var = fwd(x, hidden_p, fc_p)
    jax.block_until_ready((mu, var))

    # sanity checks
    assert mu.shape == (N, SVGP_Z_DIM)
    assert var.shape == (N, SVGP_Z_DIM)
    assert bool(jnp.all(var > 0.0))          # exp(logvar) must be positive

    # 1) tight check against a reference that uses the same bf16-at-the-dot math
    mu_b, var_b = reference_forward(x, hidden, fc, SVGP_Z_DIM, dot_dtype=jnp.bfloat16)
    assert bool(jnp.allclose(mu, mu_b, rtol=1e-2, atol=1e-2))
    assert bool(jnp.allclose(var, var_b, rtol=1e-2, atol=1e-2))

    # 2) loose check against the full-f32 reference (documents bf16 matmul error)
    mu_f, var_f = reference_forward(x, hidden, fc, SVGP_Z_DIM, dot_dtype=jnp.float32)
    assert bool(jnp.allclose(mu, mu_f, rtol=1e-1, atol=1e-1))
    assert bool(jnp.allclose(var, var_f, rtol=1e-1, atol=1e-1))

    print("KERNEL_OK")
</pallas_src>

<mosaic_0001>
module attributes {stable_mosaic.version = 11 : i64} {
  func.func @kernel(%arg0: i32, %arg1: i32, %arg2: memref<16x16xf32, #tpu.memory_space<vmem>>, %arg3: memref<16x128xbf16, #tpu.memory_space<vmem>>, %arg4: memref<1x128xf32, #tpu.memory_space<vmem>>, %arg5: memref<1x128xf32, #tpu.memory_space<vmem>>, %arg6: memref<128x128xbf16, #tpu.memory_space<vmem>>, %arg7: memref<1x128xf32, #tpu.memory_space<vmem>>, %arg8: memref<1x128xf32, #tpu.memory_space<vmem>>, %arg9: memref<128x128xbf16, #tpu.memory_space<vmem>>, %arg10: memref<1x128xf32, #tpu.memory_space<vmem>>, %arg11: memref<16x128xf32, #tpu.memory_space<vmem>>, %arg12: memref<1x128xf32, #tpu.memory_space<vmem>>, %arg13: memref<1x128xf32, #tpu.memory_space<vmem>>, %arg14: memref<1x128xf32, #tpu.memory_space<vmem>>, %arg15: memref<1x128xf32, #tpu.memory_space<vmem>>) attributes {dimension_semantics = [#tpu.dimension_semantics<arbitrary>, #tpu.dimension_semantics<arbitrary>], iteration_bounds = array<i64: 3, 3>, scalar_prefetch = 0 : i64, scratch_operands = 4 : i64, tpu.core_type = #tpu.core_type<tc>, window_params = [{transform_indices = @transform_0, window_bounds = array<i64: 16, 16>}, {pipeline_mode = #tpu.pipeline_mode<synchronous>, transform_indices = @transform_1, window_bounds = array<i64: 16, 128>}, {pipeline_mode = #tpu.pipeline_mode<synchronous>, transform_indices = @transform_2, window_bounds = array<i64: 1, 128>}, {pipeline_mode = #tpu.pipeline_mode<synchronous>, transform_indices = @transform_3, window_bounds = array<i64: 1, 128>}, {pipeline_mode = #tpu.pipeline_mode<synchronous>, transform_indices = @transform_4, window_bounds = array<i64: 128, 128>}, {pipeline_mode = #tpu.pipeline_mode<synchronous>, transform_indices = @transform_5, window_bounds = array<i64: 1, 128>}, {pipeline_mode = #tpu.pipeline_mode<synchronous>, transform_indices = @transform_6, window_bounds = array<i64: 1, 128>}, {pipeline_mode = #tpu.pipeline_mode<synchronous>, transform_indices = @transform_7, window_bounds = array<i64: 128, 128>}, {pipeline_mode = #tpu.pipeline_mode<synchronous>, transform_indices = @transform_8, window_bounds = array<i64: 1, 128>}, {transform_indices = @transform_9, window_bounds = array<i64: 16, 128>}]} {
    %c0 = arith.constant 0 : index
    %c0_0 = arith.constant 0 : index
    %0 = vector.load %arg2[%c0, %c0_0] : memref<16x16xf32, #tpu.memory_space<vmem>>, vector<16x16xf32>
    %1 = tpu.iota {dimensions = array<i32: 0>} : vector<16x1xi32>
    %c16_i32 = arith.constant 16 : i32
    %2 = arith.muli %arg1, %c16_i32 : i32
    %3 = vector.broadcast %2 : i32 to vector<16x1xi32>
    %4 = arith.addi %1, %3 : vector<16x1xi32>
    %c40_i32 = arith.constant 40 : i32
    %5 = vector.broadcast %c40_i32 : i32 to vector<16x1xi32>
    %6 = arith.cmpi slt, %4, %5 : vector<16x1xi32>
    %7 = arith.extui %6 : vector<16x1xi1> to vector<16x1xi32>
    %8 = arith.sitofp %7 : vector<16x1xi32> to vector<16x1xf32>
    %c0_i32 = arith.constant 0 : i32
    %9 = arith.cmpi eq, %arg0, %c0_i32 : i32
    %10 = arith.extui %9 : i1 to i32
    %c0_i32_1 = arith.constant 0 : i32
    %11 = arith.cmpi ne, %10, %c0_i32_1 : i32
    scf.if %11 {
      %18 = arith.truncf %0 : vector<16x16xf32> to vector<16x16xbf16>
      %c0_4 = arith.constant 0 : index
      %c0_5 = arith.constant 0 : index
      %19 = vector.load %arg3[%c0_4, %c0_5] : memref<16x128xbf16, #tpu.memory_space<vmem>>, vector<16x128xbf16>
      %cst = arith.constant dense<0.000000e+00> : vector<16x128xf32>
      %20 = tpu.matmul %18, %19, %cst {dimension_numbers = #tpu.dot_dimension_numbers<[1], [0], [0], [1], [0, 0, 1, 1], [], []>} : vector<16x16xbf16>, vector<16x128xbf16>, vector<16x128xf32> -> vector<16x128xf32>
      %c0_i32_6 = arith.constant 0 : i32
      %21 = arith.cmpi eq, %arg1, %c0_i32_6 : i32
      %22 = arith.extui %21 : i1 to i32
      %c0_i32_7 = arith.constant 0 : i32
      %23 = arith.cmpi ne, %22, %c0_i32_7 : i32
      scf.if %23 {
        %cst_20 = arith.constant 0.000000e+00 : f32
        %40 = vector.broadcast %cst_20 : f32 to vector<1x128xf32>
        %c0_21 = arith.constant 0 : index
        %c0_22 = arith.constant 0 : index
        %41 = vector.load %arg12[%c0_21, %c0_22] : memref<1x128xf32, #tpu.memory_space<vmem>>, vector<1x128xf32>
        tpu.vector_store %arg12[%c0_21, %c0_22], %40 {strides = array<i32>} : memref<1x128xf32, #tpu.memory_space<vmem>>, vector<1x128xf32>,
        %cst_23 = arith.constant 0.000000e+00 : f32
        %42 = vector.broadcast %cst_23 : f32 to vector<1x128xf32>
        %c0_24 = arith.constant 0 : index
        %c0_25 = arith.constant 0 : index
        %43 = vector.load %arg13[%c0_24, %c0_25] : memref<1x128xf32, #tpu.memory_space<vmem>>, vector<1x128xf32>
        tpu.vector_store %arg13[%c0_24, %c0_25], %42 {strides = array<i32>} : memref<1x128xf32, #tpu.memory_space<vmem>>, vector<1x128xf32>,
      } else {
      }
      %24 = vector.broadcast %8 : vector<16x1xf32> to vector<16x128xf32>
      %25 = arith.mulf %20, %24 : vector<16x128xf32>
      %c0_8 = arith.constant 0 : index
      %c0_9 = arith.constant 0 : index
      %26 = vector.load %arg12[%c0_8, %c0_9] : memref<1x128xf32, #tpu.memory_space<vmem>>, vector<1x128xf32>
      %cst_10 = arith.constant dense<0.000000e+00> : vector<128xf32>
      %27 = vector.multi_reduction <add>, %25, %cst_10 [0] : vector<16x128xf32> to vector<128xf32>
      %28 = vector.shape_cast %27 : vector<128xf32> to vector<1x128xf32>
      %29 = arith.addf %26, %28 : vector<1x128xf32>
      %c0_11 = arith.constant 0 : index
      %c0_12 = arith.constant 0 : index
      %30 = vector.load %arg12[%c0_11, %c0_12] : memref<1x128xf32, #tpu.memory_space<vmem>>, vector<1x128xf32>
      tpu.vector_store %arg12[%c0_11, %c0_12], %29 {strides = array<i32>} : memref<1x128xf32, #tpu.memory_space<vmem>>, vector<1x128xf32>,
      %c0_13 = arith.constant 0 : index
      %c0_14 = arith.constant 0 : index
      %31 = vector.load %arg13[%c0_13, %c0_14] : memref<1x128xf32, #tpu.memory_space<vmem>>, vector<1x128xf32>
      %32 = arith.mulf %25, %20 : vector<16x128xf32>
      %cst_15 = arith.constant dense<0.000000e+00> : vector<128xf32>
      %33 = vector.multi_reduction <add>, %32, %cst_15 [0] : vector<16x128xf32> to vector<128xf32>
      %34 = vector.shape_cast %33 : vector<128xf32> to vector<1x128xf32>
      %35 = arith.addf %31, %34 : vector<1x128xf32>
      %c0_16 = arith.constant 0 : index
      %c0_17 = arith.constant 0 : index
      %36 = vector.load %arg13[%c0_16, %c0_17] : memref<1x128xf32, #tpu.memory_space<vmem>>, vector<1x128xf32>
      tpu.vector_store %arg13[%c0_16, %c0_17], %35 {strides = array<i32>} : memref<1x128xf32, #tpu.memory_space<vmem>>, vector<1x128xf32>,
      %c2_i32_18 = arith.constant 2 : i32
      %37 = arith.cmpi eq, %arg1, %c2_i32_18 : i32
      %38 = arith.extui %37 : i1 to i32
      %c0_i32_19 = arith.constant 0 : i32
      %39 = arith.cmpi ne, %38, %c0_i32_19 : i32
      scf.if %39 {
        %c0_20 = arith.constant 0 : index
        %c0_21 = arith.constant 0 : index
        %40 = vector.load %arg12[%c0_20, %c0_21] : memref<1x128xf32, #tpu.memory_space<vmem>>, vector<1x128xf32>
        %cst_22 = arith.constant 2.500000e-02 : f32
        %41 = vector.broadcast %cst_22 : f32 to vector<1x128xf32>
        %42 = arith.mulf %40, %41 : vector<1x128xf32>
        %c0_23 = arith.constant 0 : index
        %c0_24 = arith.constant 0 : index
        %43 = vector.load %arg13[%c0_23, %c0_24] : memref<1x128xf32, #tpu.memory_space<vmem>>, vector<1x128xf32>
        %cst_25 = arith.constant 2.500000e-02 : f32
        %44 = vector.broadcast %cst_25 : f32 to vector<1x128xf32>
        %45 = arith.mulf %43, %44 : vector<1x128xf32>
        %46 = arith.mulf %42, %42 : vector<1x128xf32>
        %47 = arith.subf %45, %46 : vector<1x128xf32>
        %cst_26 = arith.constant 0.000000e+00 : f32
        %48 = vector.broadcast %cst_26 : f32 to vector<1x128xf32>
        %49 = arith.maximumf %47, %48 : vector<1x128xf32>
        %c0_27 = arith.constant 0 : index
        %c0_28 = arith.constant 0 : index
        %50 = vector.load %arg12[%c0_27, %c0_28] : memref<1x128xf32, #tpu.memory_space<vmem>>, vector<1x128xf32>
        tpu.vector_store %arg12[%c0_27, %c0_28], %42 {strides = array<i32>} : memref<1x128xf32, #tpu.memory_space<vmem>>, vector<1x128xf32>,
        %c0_29 = arith.constant 0 : index
        %c0_30 = arith.constant 0 : index
        %51 = vector.load %arg4[%c0_29, %c0_30] : memref<1x128xf32, #tpu.memory_space<vmem>>, vector<1x128xf32>
        %cst_31 = arith.constant 9.99999974E-6 : f32
        %52 = vector.broadcast %cst_31 : f32 to vector<1x128xf32>
        %53 = arith.addf %49, %52 : vector<1x128xf32>
        %54 = math.rsqrt %53 : vector<1x128xf32>
        %55 = arith.mulf %51, %54 : vector<1x128xf32>
        %c0_32 = arith.constant 0 : index
        %c0_33 = arith.constant 0 : index
        %56 = vector.load %arg13[%c0_32, %c0_33] : memref<1x128xf32, #tpu.memory_space<vmem>>, vector<1x128xf32>
        tpu.vector_store %arg13[%c0_32, %c0_33], %55 {strides = array<i32>} : memref<1x128xf32, #tpu.memory_space<vmem>>, vector<1x128xf32>,
      } else {
      }
    } else {
    }
    %c1_i32 = arith.constant 1 : i32
    %12 = arith.cmpi eq, %arg0, %c1_i32 : i32
    %13 = arith.extui %12 : i1 to i32
    %c0_i32_2 = arith.constant 0 : i32
    %14 = arith.cmpi ne, %13, %c0_i32_2 : i32
    scf.if %14 {
      %18 = arith.truncf %0 : vector<16x16xf32> to vector<16x16xbf16>
      %c0_4 = arith.constant 0 : index
      %c0_5 = arith.constant 0 : index
      %19 = vector.load %arg3[%c0_4, %c0_5] : memref<16x128xbf16, #tpu.memory_space<vmem>>, vector<16x128xbf16>
      %cst = arith.constant dense<0.000000e+00> : vector<16x128xf32>
      %20 = tpu.matmul %18, %19, %cst {dimension_numbers = #tpu.dot_dimension_numbers<[1], [0], [0], [1], [0, 0, 1, 1], [], []>} : vector<16x16xbf16>, vector<16x128xbf16>, vector<16x128xf32> -> vector<16x128xf32>
      %c0_6 = arith.constant 0 : index
      %c0_7 = arith.constant 0 : index
      %21 = vector.load %arg12[%c0_6, %c0_7] : memref<1x128xf32, #tpu.memory_space<vmem>>, vector<1x128xf32>
      %c0_8 = arith.constant 0 : index
      %c0_9 = arith.constant 0 : index
      %22 = vector.load %arg13[%c0_8, %c0_9] : memref<1x128xf32, #tpu.memory_space<vmem>>, vector<1x128xf32>
      %23 = vector.broadcast %21 : vector<1x128xf32> to vector<16x128xf32>
      %24 = arith.subf %20, %23 : vector<16x128xf32>
      %25 = vector.broadcast %22 : vector<1x128xf32> to vector<16x128xf32>
      %26 = arith.mulf %24, %25 : vector<16x128xf32>
      %c0_10 = arith.constant 0 : index
      %c0_11 = arith.constant 0 : index
      %27 = vector.load %arg5[%c0_10, %c0_11] : memref<1x128xf32, #tpu.memory_space<vmem>>, vector<1x128xf32>
      %28 = vector.broadcast %27 : vector<1x128xf32> to vector<16x128xf32>
      %29 = arith.addf %26, %28 : vector<16x128xf32>
      %cst_12 = arith.constant 0.000000e+00 : f32
      %30 = vector.broadcast %cst_12 : f32 to vector<16x128xf32>
      %31 = arith.cmpf oge, %29, %30 : vector<16x128xf32>
      %cst_13 = arith.constant 0.00999999977 : f32
      %32 = vector.broadcast %cst_13 : f32 to vector<16x128xf32>
      %33 = arith.mulf %32, %29 : vector<16x128xf32>
      %34 = arith.select %31, %29, %33 : vector<16x128xi1>, vector<16x128xf32>
      %35 = arith.truncf %34 : vector<16x128xf32> to vector<16x128xbf16>
      %c0_14 = arith.constant 0 : index
      %c0_15 = arith.constant 0 : index
      %36 = vector.load %arg6[%c0_14, %c0_15] : memref<128x128xbf16, #tpu.memory_space<vmem>>, vector<128x128xbf16>
      %cst_16 = arith.constant dense<0.000000e+00> : vector<16x128xf32>
      %37 = tpu.matmul %35, %36, %cst_16 {dimension_numbers = #tpu.dot_dimension_numbers<[1], [0], [0], [1], [0, 0, 1, 1], [], []>} : vector<16x128xbf16>, vector<128x128xbf16>, vector<16x128xf32> -> vector<16x128xf32>
      %c0_i32_17 = arith.constant 0 : i32
      %38 = arith.cmpi eq, %arg1, %c0_i32_17 : i32
      %39 = arith.extui %38 : i1 to i32
      %c0_i32_18 = arith.constant 0 : i32
      %40 = arith.cmpi ne, %39, %c0_i32_18 : i32
      scf.if %40 {
        %cst_31 = arith.constant 0.000000e+00 : f32
        %57 = vector.broadcast %cst_31 : f32 to vector<1x128xf32>
        %c0_32 = arith.constant 0 : index
        %c0_33 = arith.constant 0 : index
        %58 = vector.load %arg14[%c0_32, %c0_33] : memref<1x128xf32, #tpu.memory_space<vmem>>, vector<1x128xf32>
        tpu.vector_store %arg14[%c0_32, %c0_33], %57 {strides = array<i32>} : memref<1x128xf32, #tpu.memory_space<vmem>>, vector<1x128xf32>,
        %cst_34 = arith.constant 0.000000e+00 : f32
        %59 = vector.broadcast %cst_34 : f32 to vector<1x128xf32>
        %c0_35 = arith.constant 0 : index
        %c0_36 = arith.constant 0 : index
        %60 = vector.load %arg15[%c0_35, %c0_36] : memref<1x128xf32, #tpu.memory_space<vmem>>, vector<1x128xf32>
        tpu.vector_store %arg15[%c0_35, %c0_36], %59 {strides = array<i32>} : memref<1x128xf32, #tpu.memory_space<vmem>>, vector<1x128xf32>,
      } else {
      }
      %41 = vector.broadcast %8 : vector<16x1xf32> to vector<16x128xf32>
      %42 = arith.mulf %37, %41 : vector<16x128xf32>
      %c0_19 = arith.constant 0 : index
      %c0_20 = arith.constant 0 : index
      %43 = vector.load %arg14[%c0_19, %c0_20] : memref<1x128xf32, #tpu.memory_space<vmem>>, vector<1x128xf32>
      %cst_21 = arith.constant dense<0.000000e+00> : vector<128xf32>
      %44 = vector.multi_reduction <add>, %42, %cst_21 [0] : vector<16x128xf32> to vector<128xf32>
      %45 = vector.shape_cast %44 : vector<128xf32> to vector<1x128xf32>
      %46 = arith.addf %43, %45 : vector<1x128xf32>
      %c0_22 = arith.constant 0 : index
      %c0_23 = arith.constant 0 : index
      %47 = vector.load %arg14[%c0_22, %c0_23] : memref<1x128xf32, #tpu.memory_space<vmem>>, vector<1x128xf32>
      tpu.vector_store %arg14[%c0_22, %c0_23], %46 {strides = array<i32>} : memref<1x128xf32, #tpu.memory_space<vmem>>, vector<1x128xf32>,
      %c0_24 = arith.constant 0 : index
      %c0_25 = arith.constant 0 : index
      %48 = vector.load %arg15[%c0_24, %c0_25] : memref<1x128xf32, #tpu.memory_space<vmem>>, vector<1x128xf32>
      %49 = arith.mulf %42, %37 : vector<16x128xf32>
      %cst_26 = arith.constant dense<0.000000e+00> : vector<128xf32>
      %50 = vector.multi_reduction <add>, %49, %cst_26 [0] : vector<16x128xf32> to vector<128xf32>
      %51 = vector.shape_cast %50 : vector<128xf32> to vector<1x128xf32>
      %52 = arith.addf %48, %51 : vector<1x128xf32>
      %c0_27 = arith.constant 0 : index
      %c0_28 = arith.constant 0 : index
      %53 = vector.load %arg15[%c0_27, %c0_28] : memref<1x128xf32, #tpu.memory_space<vmem>>, vector<1x128xf32>
      tpu.vector_store %arg15[%c0_27, %c0_28], %52 {strides = array<i32>} : memref<1x128xf32, #tpu.memory_space<vmem>>, vector<1x128xf32>,
      %c2_i32_29 = arith.constant 2 : i32
      %54 = arith.cmpi eq, %arg1, %c2_i32_29 : i32
      %55 = arith.extui %54 : i1 to i32
      %c0_i32_30 = arith.constant 0 : i32
      %56 = arith.cmpi ne, %55, %c0_i32_30 : i32
      scf.if %56 {
        %c0_31 = arith.constant 0 : index
        %c0_32 = arith.constant 0 : index
        %57 = vector.load %arg14[%c0_31, %c0_32] : memref<1x128xf32, #tpu.memory_space<vmem>>, vector<1x128xf32>
        %cst_33 = arith.constant 2.500000e-02 : f32
        %58 = vector.broadcast %cst_33 : f32 to vector<1x128xf32>
        %59 = arith.mulf %57, %58 : vector<1x128xf32>
        %c0_34 = arith.constant 0 : index
        %c0_35 = arith.constant 0 : index
        %60 = vector.load %arg15[%c0_34, %c0_35] : memref<1x128xf32, #tpu.memory_space<vmem>>, vector<1x128xf32>
        %cst_36 = arith.constant 2.500000e-02 : f32
        %61 = vector.broadcast %cst_36 : f32 to vector<1x128xf32>
        %62 = arith.mulf %60, %61 : vector<1x128xf32>
        %63 = arith.mulf %59, %59 : vector<1x128xf32>
        %64 = arith.subf %62, %63 : vector<1x128xf32>
        %cst_37 = arith.constant 0.000000e+00 : f32
        %65 = vector.broadcast %cst_37 : f32 to vector<1x128xf32>
        %66 = arith.maximumf %64, %65 : vector<1x128xf32>
        %c0_38 = arith.constant 0 : index
        %c0_39 = arith.constant 0 : index
        %67 = vector.load %arg14[%c0_38, %c0_39] : memref<1x128xf32, #tpu.memory_space<vmem>>, vector<1x128xf32>
        tpu.vector_store %arg14[%c0_38, %c0_39], %59 {strides = array<i32>} : memref<1x128xf32, #tpu.memory_space<vmem>>, vector<1x128xf32>,
        %c0_40 = arith.constant 0 : index
        %c0_41 = arith.constant 0 : index
        %68 = vector.load %arg7[%c0_40, %c0_41] : memref<1x128xf32, #tpu.memory_space<vmem>>, vector<1x128xf32>
        %cst_42 = arith.constant 9.99999974E-6 : f32
        %69 = vector.broadcast %cst_42 : f32 to vector<1x128xf32>
        %70 = arith.addf %66, %69 : vector<1x128xf32>
        %71 = math.rsqrt %70 : vector<1x128xf32>
        %72 = arith.mulf %68, %71 : vector<1x128xf32>
        %c0_43 = arith.constant 0 : index
        %c0_44 = arith.constant 0 : index
        %73 = vector.load %arg15[%c0_43, %c0_44] : memref<1x128xf32, #tpu.memory_space<vmem>>, vector<1x128xf32>
        tpu.vector_store %arg15[%c0_43, %c0_44], %72 {strides = array<i32>} : memref<1x128xf32, #tpu.memory_space<vmem>>, vector<1x128xf32>,
      } else {
      }
    } else {
    }
    %c2_i32 = arith.constant 2 : i32
    %15 = arith.cmpi eq, %arg0, %c2_i32 : i32
    %16 = arith.extui %15 : i1 to i32
    %c0_i32_3 = arith.constant 0 : i32
    %17 = arith.cmpi ne, %16, %c0_i32_3 : i32
    scf.if %17 {
      %18 = arith.truncf %0 : vector<16x16xf32> to vector<16x16xbf16>
      %c0_4 = arith.constant 0 : index
      %c0_5 = arith.constant 0 : index
      %19 = vector.load %arg3[%c0_4, %c0_5] : memref<16x128xbf16, #tpu.memory_space<vmem>>, vector<16x128xbf16>
      %cst = arith.constant dense<0.000000e+00> : vector<16x128xf32>
      %20 = tpu.matmul %18, %19, %cst {dimension_numbers = #tpu.dot_dimension_numbers<[1], [0], [0], [1], [0, 0, 1, 1], [], []>} : vector<16x16xbf16>, vector<16x128xbf16>, vector<16x128xf32> -> vector<16x128xf32>
      %c0_6 = arith.constant 0 : index
      %c0_7 = arith.constant 0 : index
      %21 = vector.load %arg12[%c0_6, %c0_7] : memref<1x128xf32, #tpu.memory_space<vmem>>, vector<1x128xf32>
      %c0_8 = arith.constant 0 : index
      %c0_9 = arith.constant 0 : index
      %22 = vector.load %arg13[%c0_8, %c0_9] : memref<1x128xf32, #tpu.memory_space<vmem>>, vector<1x128xf32>
      %23 = vector.broadcast %21 : vector<1x128xf32> to vector<16x128xf32>
      %24 = arith.subf %20, %23 : vector<16x128xf32>
      %25 = vector.broadcast %22 : vector<1x128xf32> to vector<16x128xf32>
      %26 = arith.mulf %24, %25 : vector<16x128xf32>
      %c0_10 = arith.constant 0 : index
      %c0_11 = arith.constant 0 : index
      %27 = vector.load %arg5[%c0_10, %c0_11] : memref<1x128xf32, #tpu.memory_space<vmem>>, vector<1x128xf32>
      %28 = vector.broadcast %27 : vector<1x128xf32> to vector<16x128xf32>
      %29 = arith.addf %26, %28 : vector<16x128xf32>
      %cst_12 = arith.constant 0.000000e+00 : f32
      %30 = vector.broadcast %cst_12 : f32 to vector<16x128xf32>
      %31 = arith.cmpf oge, %29, %30 : vector<16x128xf32>
      %cst_13 = arith.constant 0.00999999977 : f32
      %32 = vector.broadcast %cst_13 : f32 to vector<16x128xf32>
      %33 = arith.mulf %32, %29 : vector<16x128xf32>
      %34 = arith.select %31, %29, %33 : vector<16x128xi1>, vector<16x128xf32>
      %35 = arith.truncf %34 : vector<16x128xf32> to vector<16x128xbf16>
      %c0_14 = arith.constant 0 : index
      %c0_15 = arith.constant 0 : index
      %36 = vector.load %arg6[%c0_14, %c0_15] : memref<128x128xbf16, #tpu.memory_space<vmem>>, vector<128x128xbf16>
      %cst_16 = arith.constant dense<0.000000e+00> : vector<16x128xf32>
      %37 = tpu.matmul %35, %36, %cst_16 {dimension_numbers = #tpu.dot_dimension_numbers<[1], [0], [0], [1], [0, 0, 1, 1], [], []>} : vector<16x128xbf16>, vector<128x128xbf16>, vector<16x128xf32> -> vector<16x128xf32>
      %c0_17 = arith.constant 0 : index
      %c0_18 = arith.constant 0 : index
      %38 = vector.load %arg14[%c0_17, %c0_18] : memref<1x128xf32, #tpu.memory_space<vmem>>, vector<1x128xf32>
      %c0_19 = arith.constant 0 : index
      %c0_20 = arith.constant 0 : index
      %39 = vector.load %arg15[%c0_19, %c0_20] : memref<1x128xf32, #tpu.memory_space<vmem>>, vector<1x128xf32>
      %40 = vector.broadcast %38 : vector<1x128xf32> to vector<16x128xf32>
      %41 = arith.subf %37, %40 : vector<16x128xf32>
      %42 = vector.broadcast %39 : vector<1x128xf32> to vector<16x128xf32>
      %43 = arith.mulf %41, %42 : vector<16x128xf32>
      %c0_21 = arith.constant 0 : index
      %c0_22 = arith.constant 0 : index
      %44 = vector.load %arg8[%c0_21, %c0_22] : memref<1x128xf32, #tpu.memory_space<vmem>>, vector<1x128xf32>
      %45 = vector.broadcast %44 : vector<1x128xf32> to vector<16x128xf32>
      %46 = arith.addf %43, %45 : vector<16x128xf32>
      %cst_23 = arith.constant 0.000000e+00 : f32
      %47 = vector.broadcast %cst_23 : f32 to vector<16x128xf32>
      %48 = arith.cmpf oge, %46, %47 : vector<16x128xf32>
      %cst_24 = arith.constant 0.00999999977 : f32
      %49 = vector.broadcast %cst_24 : f32 to vector<16x128xf32>
      %50 = arith.mulf %49, %46 : vector<16x128xf32>
      %51 = arith.select %48, %46, %50 : vector<16x128xi1>, vector<16x128xf32>
      %52 = arith.truncf %51 : vector<16x128xf32> to vector<16x128xbf16>
      %c0_25 = arith.constant 0 : index
      %c0_26 = arith.constant 0 : index
      %53 = vector.load %arg9[%c0_25, %c0_26] : memref<128x128xbf16, #tpu.memory_space<vmem>>, vector<128x128xbf16>
      %cst_27 = arith.constant dense<0.000000e+00> : vector<16x128xf32>
      %54 = tpu.matmul %52, %53, %cst_27 {dimension_numbers = #tpu.dot_dimension_numbers<[1], [0], [0], [1], [0, 0, 1, 1], [], []>} : vector<16x128xbf16>, vector<128x128xbf16>, vector<16x128xf32> -> vector<16x128xf32>
      %c0_28 = arith.constant 0 : index
      %c0_29 = arith.constant 0 : index
      %55 = vector.load %arg10[%c0_28, %c0_29] : memref<1x128xf32, #tpu.memory_space<vmem>>, vector<1x128xf32>
      %56 = vector.broadcast %55 : vector<1x128xf32> to vector<16x128xf32>
      %57 = arith.addf %54, %56 : vector<16x128xf32>
      %58 = tpu.iota {dimensions = array<i32: 1>} : vector<16x128xi32>
      %c4_i32 = arith.constant 4 : i32
      %59 = vector.broadcast %c4_i32 : i32 to vector<16x128xi32>
      %60 = arith.cmpi sge, %58, %59 : vector<16x128xi32>
      %c8_i32 = arith.constant 8 : i32
      %61 = vector.broadcast %c8_i32 : i32 to vector<16x128xi32>
      %62 = arith.cmpi slt, %58, %61 : vector<16x128xi32>
      %63 = arith.andi %60, %62 : vector<16x128xi1>
      %64 = math.exp %57 : vector<16x128xf32>
      %65 = arith.select %63, %64, %57 : vector<16x128xi1>, vector<16x128xf32>
      %c0_30 = arith.constant 0 : index
      %c0_31 = arith.constant 0 : index
      %66 = vector.load %arg11[%c0_30, %c0_31] : memref<16x128xf32, #tpu.memory_space<vmem>>, vector<16x128xf32>
      tpu.vector_store %arg11[%c0_30, %c0_31], %65 {strides = array<i32>} : memref<16x128xf32, #tpu.memory_space<vmem>>, vector<16x128xf32>,
    } else {
    }
    return
  }
  func.func @transform_0(%arg0: i32, %arg1: i32) -> (i32, i32) {
    %c0_i32 = arith.constant 0 : i32
    %c0_i32_0 = arith.constant 0 : i32
    return %arg1, %c0_i32 : i32, i32
  }
  func.func @transform_1(%arg0: i32, %arg1: i32) -> (i32, i32) {
    %c0_i32 = arith.constant 0 : i32
    %c0_i32_0 = arith.constant 0 : i32
    %c0_i32_1 = arith.constant 0 : i32
    return %c0_i32, %c0_i32_0 : i32, i32
  }
  func.func @transform_2(%arg0: i32, %arg1: i32) -> (i32, i32) {
    %c0_i32 = arith.constant 0 : i32
    %c0_i32_0 = arith.constant 0 : i32
    %c0_i32_1 = arith.constant 0 : i32
    return %c0_i32, %c0_i32_0 : i32, i32
  }
  func.func @transform_3(%arg0: i32, %arg1: i32) -> (i32, i32) {
    %c0_i32 = arith.constant 0 : i32
    %c0_i32_0 = arith.constant 0 : i32
    %c0_i32_1 = arith.constant 0 : i32
    return %c0_i32, %c0_i32_0 : i32, i32
  }
  func.func @transform_4(%arg0: i32, %arg1: i32) -> (i32, i32) {
    %c0_i32 = arith.constant 0 : i32
    %c0_i32_0 = arith.constant 0 : i32
    %c0_i32_1 = arith.constant 0 : i32
    return %c0_i32, %c0_i32_0 : i32, i32
  }
  func.func @transform_5(%arg0: i32, %arg1: i32) -> (i32, i32) {
    %c0_i32 = arith.constant 0 : i32
    %c0_i32_0 = arith.constant 0 : i32
    %c0_i32_1 = arith.constant 0 : i32
    return %c0_i32, %c0_i32_0 : i32, i32
  }
  func.func @transform_6(%arg0: i32, %arg1: i32) -> (i32, i32) {
    %c0_i32 = arith.constant 0 : i32
    %c0_i32_0 = arith.constant 0 : i32
    %c0_i32_1 = arith.constant 0 : i32
    return %c0_i32, %c0_i32_0 : i32, i32
  }
  func.func @transform_7(%arg0: i32, %arg1: i32) -> (i32, i32) {
    %c0_i32 = arith.constant 0 : i32
    %c0_i32_0 = arith.constant 0 : i32
    %c0_i32_1 = arith.constant 0 : i32
    return %c0_i32, %c0_i32_0 : i32, i32
  }
  func.func @transform_8(%arg0: i32, %arg1: i32) -> (i32, i32) {
    %c0_i32 = arith.constant 0 : i32
    %c0_i32_0 = arith.constant 0 : i32
    %c0_i32_1 = arith.constant 0 : i32
    return %c0_i32, %c0_i32_0 : i32, i32
  }
  func.func @transform_9(%arg0: i32, %arg1: i32) -> (i32, i32) {
    %c0_i32 = arith.constant 0 : i32
    %c0_i32_0 = arith.constant 0 : i32
    return %arg1, %c0_i32 : i32, i32
  }
}

</mosaic_0001>

<llo_original>
// kernel: svgp_encoder_forward.1
$region0: #{svgp_encoder_forward.1}
  #allocation0 [shape = 'u32[]', space=smem, size = 0x4, offset = 0x4, fixed_abs, tag = 'smem constant byte address 0x4 - core index']
  #allocation1 [shape = 'u32[72,128]{1,0:T(1,128)}', space=vmem, size = 0x9000, scoped, tag = 'internal scratch']
  #allocation2 [shape = 'f32[1,128]{1,0:T(1,128)}', space=vmem, size = 0x200, scoped, tag = 'scratch operand']
  #allocation3 [shape = 'f32[1,128]{1,0:T(1,128)}', space=vmem, size = 0x200, scoped, tag = 'scratch operand']
  #allocation4 [shape = 'f32[1,128]{1,0:T(1,128)}', space=vmem, size = 0x200, scoped, tag = 'scratch operand']
  #allocation5 [shape = 'f32[1,128]{1,0:T(1,128)}', space=vmem, size = 0x200, scoped, tag = 'scratch operand']
  %s0 = inlined_call_operand.vmem [shape: f32[48,16], index: 0, kind: input, shape index: {}]
  %s1 = inlined_call_operand.vmem [shape: bf16[16,128], index: 1, kind: input, shape index: {}]
  %s2 = inlined_call_operand.vmem [shape: f32[1,128], index: 2, kind: input, shape index: {}]
  %s3 = inlined_call_operand.vmem [shape: f32[1,128], index: 3, kind: input, shape index: {}]
  %s4 = inlined_call_operand.vmem [shape: bf16[128,128], index: 4, kind: input, shape index: {}]
  %s5 = inlined_call_operand.vmem [shape: f32[1,128], index: 5, kind: input, shape index: {}]
  %s6 = inlined_call_operand.vmem [shape: f32[1,128], index: 6, kind: input, shape index: {}]
  %s7 = inlined_call_operand.vmem [shape: bf16[128,128], index: 7, kind: input, shape index: {}]
  %s8 = inlined_call_operand.vmem [shape: f32[1,128], index: 8, kind: input, shape index: {}]
  %s9 = inlined_call_operand.vmem [shape: f32[48,128], index: 9, kind: output, shape index: {}]
  %s10 = sld [smem:[#allocation0]]
  $region97: #{svgp_encoder_forward.1} parent=0
    _
  %s12 = ssub.s32 1, %s10
  %s13 = scalar_select 0, %s12, %s10
  loop: start=0, step=1, limit=11
  $region2: #{svgp_encoder_forward.1} parent=0 // loop_pre_header
    _
  $region3: #{svgp_encoder_forward.1} parent=0 // loop_header
    %s15 = sphi 0, %s19
    %p16 = scmp.ge.s32.totalorder %s15, 11
    %s22 = sphi 0, %s34
    %s23 = sphi 0, %s30
    %s24 = sphi 0, %s22
    %s25 = sphi 0, %s23
    %s26 = sphi 0, %s24
    %s27 = sphi 0, %s25
    %s37 = sphi 0, %s39
    %s40 = sphi 0, %s37
    %s41 = sphi 0, %s40
    %s57 = sphi 0, %s41
    %s61 = sphi 0, %s61
    %s63 = sphi 0, %s61
    %s64 = sphi 0, %s63
    %s78 = sphi 0, %s64
    %s82 = sphi 0, %s82
    %s84 = sphi 0, %s82
    %s85 = sphi 0, %s84
    %s99 = sphi 0, %s85
    %s103 = sphi 0, %s103
    %s105 = sphi 0, %s103
    %s106 = sphi 0, %s105
    %s120 = sphi 0, %s106
    %s124 = sphi 0, %s124
    %s126 = sphi 0, %s124
    %s127 = sphi 0, %s126
    %s141 = sphi 0, %s127
    %s145 = sphi 0, %s145
    %s147 = sphi 0, %s145
    %s148 = sphi 0, %s147
    %s162 = sphi 0, %s148
    %s166 = sphi 0, %s166
    %s168 = sphi 0, %s166
    %s169 = sphi 0, %s168
    %s183 = sphi 0, %s169
    %s187 = sphi 0, %s187
    %s189 = sphi 0, %s187
    %s190 = sphi 0, %s189
    %s204 = sphi 0, %s190
    %s208 = sphi 0, %s208
    %s210 = sphi 0, %s208
    %s211 = sphi 0, %s210
    %s225 = sphi 0, %s211
    %s231 = sphi 0, %s233
    %s234 = sphi 0, %s231
    %s235 = sphi 0, %s234
    %s251 = sphi 0, %s235
  $region4: #{svgp_encoder_forward.1} parent=0 // loop_header_branch
    %18 = sbr.rel (%p16) target = $region8
  $region5: #{svgp_encoder_forward.1} parent=0 // loop_body
    %s20 = ssub.s32 %s15, 1
    %s21 = ssub.s32 %s15, 2
    %s28 = sadd.s32 1, %s23
    %p29 = scmp.ge.s32.totalorder %s28, 3
    %s30 = scalar_select %p29, 0, %s28
    %s31 = sadd.s32 1, %s22
    %s32 = scalar_select %p29, %s31, %s22
    %p33 = scmp.ge.s32.totalorder %s32, 3
    %s34 = scalar_select %p33, 0, %s32
    %s35 = ssub.s32 %s23, %s30
    %p36 = scmp.eq.s32.totalorder %s35, 0
    %s38 = sadd.s32 %s37, 1
    %s39 = scalar_select %p36, %s37, %s38
    %p42 = pneg %p36
    %p43 = scmp.eq.s32.totalorder %s15, 8
    %p44 = por %p42, %p43
    %p45 = scmp.ne.s32.totalorder %s37, %s40
    %p46 = scmp.eq.s32.totalorder %s15, 0
    %p47 = por %p45, %p46
    %p48 = scmp.ne.s32.totalorder %s37, %s40
    %p49 = scmp.eq.s32.totalorder %s20, 8
    %p50 = por %p48, %p49
    %p51 = scmp.ne.s32.totalorder %s40, %s41
    %p52 = scmp.eq.s32.totalorder %s20, 0
    %p53 = por %p51, %p52
    %p54 = scmp.ne.s32.totalorder %s40, %s41
    %p55 = scmp.eq.s32.totalorder %s21, 8
    %p56 = por %p54, %p55
    %p58 = scmp.ne.s32.totalorder %s41, %s57
    %p59 = scmp.eq.s32.totalorder %s21, 0
    %p60 = por %p58, %p59
    %s62 = sadd.s32 %s61, 1
    %p65 = scmp.eq.s32.totalorder %s15, 8
    %p66 = scmp.ne.s32.totalorder %s61, %s63
    %p67 = scmp.eq.s32.totalorder %s15, 0
    %p68 = por %p66, %p67
    %p69 = scmp.ne.s32.totalorder %s61, %s63
    %p70 = scmp.eq.s32.totalorder %s20, 8
    %p71 = por %p69, %p70
    %p72 = scmp.ne.s32.totalorder %s63, %s64
    %p73 = scmp.eq.s32.totalorder %s20, 0
    %p74 = por %p72, %p73
    %p75 = scmp.ne.s32.totalorder %s63, %s64
    %p76 = scmp.eq.s32.totalorder %s21, 8
    %p77 = por %p75, %p76
    %p79 = scmp.ne.s32.totalorder %s64, %s78
    %p80 = scmp.eq.s32.totalorder %s21, 0
    %p81 = por %p79, %p80
    %s83 = sadd.s32 %s82, 1
    %p86 = scmp.eq.s32.totalorder %s15, 8
    %p87 = scmp.ne.s32.totalorder %s82, %s84
    %p88 = scmp.eq.s32.totalorder %s15, 0
    %p89 = por %p87, %p88
    %p90 = scmp.ne.s32.totalorder %s82, %s84
    %p91 = scmp.eq.s32.totalorder %s20, 8
    %p92 = por %p90, %p91
    %p93 = scmp.ne.s32.totalorder %s84, %s85
    %p94 = scmp.eq.s32.totalorder %s20, 0
    %p95 = por %p93, %p94
    %p96 = scmp.ne.s32.totalorder %s84, %s85
    %p97 = scmp.eq.s32.totalorder %s21, 8
    %p98 = por %p96, %p97
    %p100 = scmp.ne.s32.totalorder %s85, %s99
    %p101 = scmp.eq.s32.totalorder %s21, 0
    %p102 = por %p100, %p101
    %s104 = sadd.s32 %s103, 1
    %p107 = scmp.eq.s32.totalorder %s15, 8
    %p108 = scmp.ne.s32.totalorder %s103, %s105
    %p109 = scmp.eq.s32.totalorder %s15, 0
    %p110 = por %p108, %p109
    %p111 = scmp.ne.s32.totalorder %s103, %s105
    %p112 = scmp.eq.s32.totalorder %s20, 8
    %p113 = por %p111, %p112
    %p114 = scmp.ne.s32.totalorder %s105, %s106
    %p115 = scmp.eq.s32.totalorder %s20, 0
    %p116 = por %p114, %p115
    %p117 = scmp.ne.s32.totalorder %s105, %s106
    %p118 = scmp.eq.s32.totalorder %s21, 8
    %p119 = por %p117, %p118
    %p121 = scmp.ne.s32.totalorder %s106, %s120
    %p122 = scmp.eq.s32.totalorder %s21, 0
    %p123 = por %p121, %p122
    %s125 = sadd.s32 %s124, 1
    %p128 = scmp.eq.s32.totalorder %s15, 8
    %p129 = scmp.ne.s32.totalorder %s124, %s126
    %p130 = scmp.eq.s32.totalorder %s15, 0
    %p131 = por %p129, %p130
    %p132 = scmp.ne.s32.totalorder %s124, %s126
    %p133 = scmp.eq.s32.totalorder %s20, 8
    %p134 = por %p132, %p133
    %p135 = scmp.ne.s32.totalorder %s126, %s127
    %p136 = scmp.eq.s32.totalorder %s20, 0
    %p137 = por %p135, %p136
    %p138 = scmp.ne.s32.totalorder %s126, %s127
    %p139 = scmp.eq.s32.totalorder %s21, 8
    %p140 = por %p138, %p139
    %p142 = scmp.ne.s32.totalorder %s127, %s141
    %p143 = scmp.eq.s32.totalorder %s21, 0
    %p144 = por %p142, %p143
    %s146 = sadd.s32 %s145, 1
    %p149 = scmp.eq.s32.totalorder %s15, 8
    %p150 = scmp.ne.s32.totalorder %s145, %s147
    %p151 = scmp.eq.s32.totalorder %s15, 0
    %p152 = por %p150, %p151
    %p153 = scmp.ne.s32.totalorder %s145, %s147
    %p154 = scmp.eq.s32.totalorder %s20, 8
    %p155 = por %p153, %p154
    %p156 = scmp.ne.s32.totalorder %s147, %s148
    %p157 = scmp.eq.s32.totalorder %s20, 0
    %p158 = por %p156, %p157
    %p159 = scmp.ne.s32.totalorder %s147, %s148
    %p160 = scmp.eq.s32.totalorder %s21, 8
    %p161 = por %p159, %p160
    %p163 = scmp.ne.s32.totalorder %s148, %s162
    %p164 = scmp.eq.s32.totalorder %s21, 0
    %p165 = por %p163, %p164
    %s167 = sadd.s32 %s166, 1
    %p170 = scmp.eq.s32.totalorder %s15, 8
    %p171 = scmp.ne.s32.totalorder %s166, %s168
    %p172 = scmp.eq.s32.totalorder %s15, 0
    %p173 = por %p171, %p172
    %p174 = scmp.ne.s32.totalorder %s166, %s168
    %p175 = scmp.eq.s32.totalorder %s20, 8
    %p176 = por %p174, %p175
    %p177 = scmp.ne.s32.totalorder %s168, %s169
    %p178 = scmp.eq.s32.totalorder %s20, 0
    %p179 = por %p177, %p178
    %p180 = scmp.ne.s32.totalorder %s168, %s169
    %p181 = scmp.eq.s32.totalorder %s21, 8
    %p182 = por %p180, %p181
    %p184 = scmp.ne.s32.totalorder %s169, %s183
    %p185 = scmp.eq.s32.totalorder %s21, 0
    %p186 = por %p184, %p185
    %s188 = sadd.s32 %s187, 1
    %p191 = scmp.eq.s32.totalorder %s15, 8
    %p192 = scmp.ne.s32.totalorder %s187, %s189
    %p193 = scmp.eq.s32.totalorder %s15, 0
    %p194 = por %p192, %p193
    %p195 = scmp.ne.s32.totalorder %s187, %s189
    %p196 = scmp.eq.s32.totalorder %s20, 8
    %p197 = por %p195, %p196
    %p198 = scmp.ne.s32.totalorder %s189, %s190
    %p199 = scmp.eq.s32.totalorder %s20, 0
    %p200 = por %p198, %p199
    %p201 = scmp.ne.s32.totalorder %s189, %s190
    %p202 = scmp.eq.s32.totalorder %s21, 8
    %p203 = por %p201, %p202
    %p205 = scmp.ne.s32.totalorder %s190, %s204
    %p206 = scmp.eq.s32.totalorder %s21, 0
    %p207 = por %p205, %p206
    %s209 = sadd.s32 %s208, 1
    %p212 = scmp.eq.s32.totalorder %s15, 8
    %p213 = scmp.ne.s32.totalorder %s208, %s210
    %p214 = scmp.eq.s32.totalorder %s15, 0
    %p215 = por %p213, %p214
    %p216 = scmp.ne.s32.totalorder %s208, %s210
    %p217 = scmp.eq.s32.totalorder %s20, 8
    %p218 = por %p216, %p217
    %p219 = scmp.ne.s32.totalorder %s210, %s211
    %p220 = scmp.eq.s32.totalorder %s20, 0
    %p221 = por %p219, %p220
    %p222 = scmp.ne.s32.totalorder %s210, %s211
    %p223 = scmp.eq.s32.totalorder %s21, 8
    %p224 = por %p222, %p223
    %p226 = scmp.ne.s32.totalorder %s211, %s225
    %p227 = scmp.eq.s32.totalorder %s21, 0
    %p228 = por %p226, %p227
    %s229 = ssub.s32 %s23, %s30
    %p230 = scmp.eq.s32.totalorder %s229, 0
    %s232 = sadd.s32 %s231, 1
    %s233 = scalar_select %p230, %s231, %s232
    %p236 = pneg %p230
    %p237 = scmp.eq.s32.totalorder %s15, 8
    %p238 = por %p236, %p237
    %p239 = scmp.ne.s32.totalorder %s231, %s234
    %p240 = scmp.eq.s32.totalorder %s15, 0
    %p241 = por %p239, %p240
    %p242 = scmp.ne.s32.totalorder %s231, %s234
    %p243 = scmp.eq.s32.totalorder %s20, 8
    %p244 = por %p242, %p243
    %p245 = scmp.ne.s32.totalorder %s234, %s235
    %p246 = scmp.eq.s32.totalorder %s20, 0
    %p247 = por %p245, %p246
    %p248 = scmp.ne.s32.totalorder %s234, %s235
    %p249 = scmp.eq.s32.totalorder %s21, 8
    %p250 = por %p248, %p249
    %p252 = scmp.ne.s32.totalorder %s235, %s251
    %p253 = scmp.eq.s32.totalorder %s21, 0
    %p254 = por %p252, %p253
    %p255 = scmp.le.s32.totalorder 1, %s15
    %p256 = scmp.lt.s32.totalorder %s15, 10
    %p257 = pnand %p255, %p256
    %p258 = pneg %p257
    // Predicated region
    $region9: #{svgp_encoder_forward.1} parent=5 // pred_check
      _
    $region10: #{svgp_encoder_forward.1} parent=5 // pred_check_branch
      %260 = sbr.rel (%p257) target = $region12
    $region11: #{svgp_encoder_forward.1} parent=5 // pred_region
      %s261 = ssub.s32 %s15, 1
      // Predicated region
      $region13: #{svgp_encoder_forward.1} parent=11 // pred_check
        %p262 = pneg %p74
      $region14: #{svgp_encoder_forward.1} parent=11 // pred_check_branch
        %264 = sbr.rel (%p262) target = $region16
      $region15: #{svgp_encoder_forward.1} parent=11 // pred_region
        _
      $region16: #{svgp_encoder_forward.1} parent=11 // pred_fallthru
        _
      // Predicated region
      $region17: #{svgp_encoder_forward.1} parent=11 // pred_check
        %p265 = pneg %p95
      $region18: #{svgp_encoder_forward.1} parent=11 // pred_check_branch
        %267 = sbr.rel (%p265) target = $region20
      $region19: #{svgp_encoder_forward.1} parent=11 // pred_region
        _
      $region20: #{svgp_encoder_forward.1} parent=11 // pred_fallthru
        _
      // Predicated region
      $region21: #{svgp_encoder_forward.1} parent=11 // pred_check
        %p268 = pneg %p116
      $region22: #{svgp_encoder_forward.1} parent=11 // pred_check_branch
        %270 = sbr.rel (%p268) target = $region24
      $region23: #{svgp_encoder_forward.1} parent=11 // pred_region
        _
      $region24: #{svgp_encoder_forward.1} parent=11 // pred_fallthru
        _
      // Predicated region
      $region25: #{svgp_encoder_forward.1} parent=11 // pred_check
        %p271 = pneg %p137
      $region26: #{svgp_encoder_forward.1} parent=11 // pred_check_branch
        %273 = sbr.rel (%p271) target = $region28
      $region27: #{svgp_encoder_forward.1} parent=11 // pred_region
        _
      $region28: #{svgp_encoder_forward.1} parent=11 // pred_fallthru
        _
      // Predicated region
      $region29: #{svgp_encoder_forward.1} parent=11 // pred_check
        %p274 = pneg %p158
      $region30: #{svgp_encoder_forward.1} parent=11 // pred_check_branch
        %276 = sbr.rel (%p274) target = $region32
      $region31: #{svgp_encoder_forward.1} parent=11 // pred_region
        _
      $region32: #{svgp_encoder_forward.1} parent=11 // pred_fallthru
        _
      // Predicated region
      $region33: #{svgp_encoder_forward.1} parent=11 // pred_check
        %p277 = pneg %p179
      $region34: #{svgp_encoder_forward.1} parent=11 // pred_check_branch
        %279 = sbr.rel (%p277) target = $region36
      $region35: #{svgp_encoder_forward.1} parent=11 // pred_region
        _
      $region36: #{svgp_encoder_forward.1} parent=11 // pred_fallthru
        _
      // Predicated region
      $region37: #{svgp_encoder_forward.1} parent=11 // pred_check
        %p280 = pneg %p200
      $region38: #{svgp_encoder_forward.1} parent=11 // pred_check_branch
        %282 = sbr.rel (%p280) target = $region40
      $region39: #{svgp_encoder_forward.1} parent=11 // pred_region
        _
      $region40: #{svgp_encoder_forward.1} parent=11 // pred_fallthru
        _
      // Predicated region
      $region41: #{svgp_encoder_forward.1} parent=11 // pred_check
        %p283 = pneg %p221
      $region42: #{svgp_encoder_forward.1} parent=11 // pred_check_branch
        %285 = sbr.rel (%p283) target = $region44
      $region43: #{svgp_encoder_forward.1} parent=11 // pred_region
        _
      $region44: #{svgp_encoder_forward.1} parent=11 // pred_fallthru
        _
    $region12: #{svgp_encoder_forward.1} parent=5 // pred_fallthru
      _
    %p286 = scmp.lt.s32.totalorder %s15, 9
    // Predicated region
    $region45: #{svgp_encoder_forward.1} parent=5 // pred_check
      %p287 = pneg %p286
    $region46: #{svgp_encoder_forward.1} parent=5 // pred_check_branch
      %289 = sbr.rel (%p287) target = $region48
    $region47: #{svgp_encoder_forward.1} parent=5 // pred_region
      // Predicated region
      $region49: #{svgp_encoder_forward.1} parent=47 // pred_check
        %p290 = pneg %p47
      $region50: #{svgp_encoder_forward.1} parent=47 // pred_check_branch
        %292 = sbr.rel (%p290) target = $region52
      $region51: #{svgp_encoder_forward.1} parent=47 // pred_region
        %s293 = smul.u32 2, %s23
        %p294 = scmp.lt.s32.totalorder %s293, 5
        %s295 = scalar_select %p294, %s293, 5
        %s296 = smul.addr %s295, 8
        %s297 = scalar_lea.vmem %s0, %s296
        %s298 = smul.u32 2, %s23
      $region52: #{svgp_encoder_forward.1} parent=47 // pred_fallthru
        _
    $region48: #{svgp_encoder_forward.1} parent=5 // pred_fallthru
      _
    %p299 = scmp.le.s32.totalorder 1, %s15
    %p300 = scmp.lt.s32.totalorder %s15, 10
    %p301 = pnand %p299, %p300
    %p302 = pneg %p301
    // Predicated region
    $region53: #{svgp_encoder_forward.1} parent=5 // pred_check
      _
    $region54: #{svgp_encoder_forward.1} parent=5 // pred_check_branch
      %304 = sbr.rel (%p301) target = $region56
    $region55: #{svgp_encoder_forward.1} parent=5 // pred_region
      %s305 = ssub.s32 %s15, 1
      %s306 = smul.u32 2, %s25
      %p307 = scmp.lt.s32.totalorder %s306, 5
      %s308 = scalar_select %p307, %s306, 5
      %s309 = smul.addr %s308, 8
      %s310 = scalar_lea.vmem %s0, %s309
      %p311 = pneg %p53
      %p312 = pneg %p50
      %p313 = pneg %p74
      %p314 = pneg %p71
      %p315 = pneg %p95
      %p316 = pneg %p92
      %p317 = pneg %p116
      %p318 = pneg %p113
      %p319 = pneg %p137
      %p320 = pneg %p134
      %p321 = pneg %p158
      %p322 = pneg %p155
      %p323 = pneg %p179
      %p324 = pneg %p176
      %p325 = pneg %p200
      %p326 = pneg %p197
      %p327 = pneg %p221
      %p328 = pneg %p218
      %p329 = pneg %p247
      %p330 = pneg %p244
      %s331 = smul.u32 2, %s25
      %p332 = scmp.lt.s32.totalorder %s331, 5
      %s333 = scalar_select %p332, %s331, 5
      %s334 = smul.addr %s333, 8
      %s335 = scalar_lea.vmem %s9, %s334
      %s336 = smul.u32 2, %s25
      %p337 = scmp.lt.s32.totalorder %s336, 5
      %s338 = scalar_select %p337, %s336, 5
      %s339 = smul.addr %s338, 8
      %s340 = scalar_lea.vmem %s0, %s339
      %s341 = smul.u32 2, %s25
      %s342 = smul.u32 2, %s25
      %p343 = scmp.lt.s32.totalorder %s342, 5
      %s344 = scalar_select %p343, %s342, 5
      %s345 = smul.addr %s344, 8
      %s346 = scalar_lea.vmem %s9, %s345
      %s347 = smul.u32 2, %s25
      %v349 = vld [vmem:[%s340] sm:$0xff]
      %v350 = vld [vmem:[%s340 + $0x8] sm:$0xff]
      %v351 = vlaneseq
      %v352 = vshrl.u32 %v351, 7
      %v353 = vadd.s32 %v352, 8
      %s354 = smul.u32 %s25, 16
      %v355 = vstv %s354
      %v356 = vadd.s32 %v352, %v355
      %v357 = vadd.s32 %v353, %v355
      %vm358 = vcmp.lt.s32.totalorder %v356, 40
      %vm359 = vcmp.lt.s32.totalorder %v357, 40
      %v360 = vsel %vm358, 1, 0
      %v361 = vsel %vm359, 1, 0
      %v362 = vcvt.s32.f32 %v360
      %v363 = vcvt.s32.f32 %v361
      %p364 = scmp.eq.s32.totalorder %s24, 0
      // Predicated region
      $region57: #{svgp_encoder_forward.1} parent=55 // pred_check
        %p365 = pneg %p364
      $region58: #{svgp_encoder_forward.1} parent=55 // pred_check_branch
        %367 = sbr.rel (%p365) target = $region60
      $region59: #{svgp_encoder_forward.1} parent=55 // pred_region
        %v368 = vpack.c.bf16 %v350, %v349
        %v369 = vld [vmem:[%s1] sm:$0xf]
        %v370 = vld [vmem:[%s1 + $0x4] sm:$0xf]
        %v373 = vunpack.c.l.b16 %v369
        %v374 = vunpack.c.l.b16 %v370
        %v375 = vpack.c.b16 %v374, %v373
        %vm377 = vcmask 130048
        %v379 = vsel %vm377, %v368, 0
        %381 = vmatpush.bf16.msra.mxu0 0
        %382 = vmatpush.bf16.msra.mxu0 0
        %383 = vmatpush.bf16.msra.mxu0 0
        %384 = vmatpush.bf16.msra.mxu0 0
        %385 = vmatpush.bf16.msra.mxu0 0
        %386 = vmatpush.bf16.msra.mxu0 0
        %387 = vmatpush.bf16.msra.mxu0 0
        %388 = vmatpush.bf16.msra.mxu0 %v375
        %389 = vmatmul.bf16.gmra.mxu0 %v379
        %v390 = vpop.f32.mrf.mxu0
        %v391 = vadd.f32 0.0, %v390
        %v392 = vpop.f32.mrf.mxu0
        %v393 = vadd.f32 0.0, %v392
        %394 = vdwg.mxu0
        %p395 = scmp.eq.s32.totalorder %s25, 0
        // Predicated region
        $region61: #{svgp_encoder_forward.1} parent=59 // pred_check
          %p396 = pneg %p395
        $region62: #{svgp_encoder_forward.1} parent=59 // pred_check_branch
          %398 = sbr.rel (%p396) target = $region64
        $region63: #{svgp_encoder_forward.1} parent=59 // pred_region
          %399 = vst [vmem:[#allocation2] sm:$0x1] 0.0
          %400 = vst [vmem:[#allocation3] sm:$0x1] 0.0
        $region64: #{svgp_encoder_forward.1} parent=59 // pred_fallthru
          _
        %v401 = vmul.f32 %v391, %v362
        %v402 = vmul.f32 %v393, %v363
        %v403 = vld [vmem:[#allocation2] sm:$0x1]
        %v404 = vadd.f32 %v401, %v402
        %v405 = vrot.slane %v404, 4
        %v406 = vadd.f32 %v404, %v405
        %v407 = vrot.slane %v406, 2
        %v408 = vadd.f32 %v406, %v407
        %v409 = vrot.slane %v408, 1
        %v410 = vadd.f32 %v408, %v409
        %v411 = vadd.f32 %v403, %v410
        %412 = vst [vmem:[#allocation2] sm:$0x1] %v411
        %v413 = vld [vmem:[#allocation3] sm:$0x1]
        %v414 = vmul.f32 %v401, %v391
        %v415 = vmul.f32 %v402, %v393
        %v416 = vadd.f32 %v414, %v415
        %v417 = vrot.slane %v416, 4
        %v418 = vadd.f32 %v416, %v417
        %v419 = vrot.slane %v418, 2
        %v420 = vadd.f32 %v418, %v419
        %v421 = vrot.slane %v420, 1
        %v422 = vadd.f32 %v420, %v421
        %v423 = vadd.f32 %v413, %v422
        %424 = vst [vmem:[#allocation3] sm:$0x1] %v423
        %p425 = scmp.eq.s32.totalorder %s25, 2
        // Predicated region
        $region65: #{svgp_encoder_forward.1} parent=59 // pred_check
          %p426 = pneg %p425
        $region66: #{svgp_encoder_forward.1} parent=59 // pred_check_branch
          %428 = sbr.rel (%p426) target = $region68
        $region67: #{svgp_encoder_forward.1} parent=59 // pred_region
          %v429 = vld [vmem:[#allocation2] sm:$0x1]
          %v430 = vmul.f32 %v429, 0.025
          %v431 = vld [vmem:[#allocation3] sm:$0x1]
          %v432 = vmul.f32 %v431, 0.025
          %v433 = vmul.f32 %v430, %v430
          %v434 = vsub.f32 %v432, %v433
          %v435 = vmax.f32 %v434, 0.0
          %436 = vst [vmem:[#allocation2] sm:$0x1] %v430
          %v437 = vld [vmem:[%s2] sm:$0x1]
          %v438 = vadd.f32 %v435, 1e-05
          %v439 = vrsqrt.pop %v438
          %v440 = vmul.f32 %v439, %v438
          %v441 = vmul.f32 %v440, %v439
          %v442 = vmul.f32 0.5, %v441
          %v443 = vsub.f32 1.5, %v442
          %v444 = vmul.f32 %v439, %v443
          %vm445 = vweird.f32 %v438
          %vm446 = vweird.f32 %v439
          %vm447 = vmor %vm445, %vm446
          %v448 = vsel %vm447, %v439, %v444
          %v449 = vmul.f32 %v437, %v448
          %450 = vst [vmem:[#allocation3] sm:$0x1] %v449
        $region68: #{svgp_encoder_forward.1} parent=59 // pred_fallthru
          _
      $region60: #{svgp_encoder_forward.1} parent=55 // pred_fallthru
        _
      %p451 = scmp.eq.s32.totalorder %s24, 1
      // Predicated region
      $region69: #{svgp_encoder_forward.1} parent=55 // pred_check
        %p452 = pneg %p451
      $region70: #{svgp_encoder_forward.1} parent=55 // pred_check_branch
        %454 = sbr.rel (%p452) target = $region72
      $region71: #{svgp_encoder_forward.1} parent=55 // pred_region
        %v455 = vpack.c.bf16 %v350, %v349
        %v456 = vld [vmem:[%s1] sm:$0xf]
        %v457 = vld [vmem:[%s1 + $0x4] sm:$0xf]
        %v460 = vunpack.c.l.b16 %v456
        %v461 = vunpack.c.l.b16 %v457
        %v462 = vpack.c.b16 %v461, %v460
        %vm464 = vcmask 130048
        %v466 = vsel %vm464, %v455, 0
        %468 = vmatpush.bf16.msra.mxu0 0
        %469 = vmatpush.bf16.msra.mxu0 0
        %470 = vmatpush.bf16.msra.mxu0 0
        %471 = vmatpush.bf16.msra.mxu0 0
        %472 = vmatpush.bf16.msra.mxu0 0
        %473 = vmatpush.bf16.msra.mxu0 0
        %474 = vmatpush.bf16.msra.mxu0 0
        %475 = vmatpush.bf16.msra.mxu0 %v462
        %476 = vmatmul.bf16.gmra.mxu0 %v466
        %v477 = vpop.f32.mrf.mxu0
        %v478 = vadd.f32 0.0, %v477
        %v479 = vpop.f32.mrf.mxu0
        %v480 = vadd.f32 0.0, %v479
        %481 = vdwg.mxu0
        %v482 = vld [vmem:[#allocation2] sm:$0x1]
        %v483 = vld [vmem:[#allocation3] sm:$0x1]
        %v485 = vperm.slane %v482, 0
        %v487 = vsub.f32 %v478, %v485
        %v488 = vsub.f32 %v480, %v485
        %v490 = vperm.slane %v483, 0
        %v492 = vmul.f32 %v487, %v490
        %v493 = vmul.f32 %v488, %v490
        %v494 = vld [vmem:[%s3] sm:$0x1]
        %v496 = vperm.slane %v494, 0
        %v498 = vadd.f32 %v492, %v496
        %v499 = vadd.f32 %v493, %v496
        %vm500 = vcmp.ge.f32.partialorder %v498, 0.0
        %vm501 = vcmp.ge.f32.partialorder %v499, 0.0
        %v502 = vmul.f32 %v498, 0.01
        %v503 = vmul.f32 %v499, 0.01
        %v504 = vsel %vm500, %v498, %v502
        %v505 = vsel %vm501, %v499, %v503
        %v506 = vpack.c.bf16 %v505, %v504
        %v507 = vld [vmem:[%s4] sm:$0xf]
        %v508 = vld [vmem:[%s4 + $0x4] sm:$0xf]
        %v509 = vld [vmem:[%s4 + $0x8] sm:$0xf]
        %v510 = vld [vmem:[%s4 + $0xc] sm:$0xf]
        %v511 = vld [vmem:[%s4 + $0x10] sm:$0xf]
        %v512 = vld [vmem:[%s4 + $0x14] sm:$0xf]
        %v513 = vld [vmem:[%s4 + $0x18] sm:$0xf]
        %v514 = vld [vmem:[%s4 + $0x1c] sm:$0xf]
        %v515 = vld [vmem:[%s4 + $0x20] sm:$0xf]
        %v516 = vld [vmem:[%s4 + $0x24] sm:$0xf]
        %v517 = vld [vmem:[%s4 + $0x28] sm:$0xf]
        %v518 = vld [vmem:[%s4 + $0x2c] sm:$0xf]
        %v519 = vld [vmem:[%s4 + $0x30] sm:$0xf]
        %v520 = vld [vmem:[%s4 + $0x34] sm:$0xf]
        %v521 = vld [vmem:[%s4 + $0x38] sm:$0xf]
        %v522 = vld [vmem:[%s4 + $0x3c] sm:$0xf]
        %v539 = vunpack.c.l.b16 %v507
        %v540 = vunpack.c.l.b16 %v508
        %v541 = vunpack.c.l.b16 %v509
        %v542 = vunpack.c.l.b16 %v510
        %v543 = vunpack.c.l.b16 %v511
        %v544 = vunpack.c.l.b16 %v512
        %v545 = vunpack.c.l.b16 %v513
        %v546 = vunpack.c.l.b16 %v514
        %v547 = vunpack.c.l.b16 %v515
        %v548 = vunpack.c.l.b16 %v516
        %v549 = vunpack.c.l.b16 %v517
        %v550 = vunpack.c.l.b16 %v518
        %v551 = vunpack.c.l.b16 %v519
        %v552 = vunpack.c.l.b16 %v520
        %v553 = vunpack.c.l.b16 %v521
        %v554 = vunpack.c.l.b16 %v522
        %v555 = vpack.c.b16 %v540, %v539
        %v556 = vpack.c.b16 %v542, %v541
        %v557 = vpack.c.b16 %v544, %v543
        %v558 = vpack.c.b16 %v546, %v545
        %v559 = vpack.c.b16 %v548, %v547
        %v560 = vpack.c.b16 %v550, %v549
        %v561 = vpack.c.b16 %v552, %v551
        %v562 = vpack.c.b16 %v554, %v553
        %571 = vmatpush.bf16.msra.mxu0 %v562
        %572 = vmatpush.bf16.msra.mxu0 %v561
        %573 = vmatpush.bf16.msra.mxu0 %v560
        %574 = vmatpush.bf16.msra.mxu0 %v559
        %575 = vmatpush.bf16.msra.mxu0 %v558
        %576 = vmatpush.bf16.msra.mxu0 %v557
        %577 = vmatpush.bf16.msra.mxu0 %v556
        %578 = vmatpush.bf16.msra.mxu0 %v555
        %579 = vmatmul.bf16.gmra.mxu0 %v506
        %v580 = vpop.f32.mrf.mxu0
        %v581 = vadd.f32 0.0, %v580
        %v582 = vpop.f32.mrf.mxu0
        %v583 = vadd.f32 0.0, %v582
        %584 = vdwg.mxu0
        %p585 = scmp.eq.s32.totalorder %s25, 0
        // Predicated region
        $region73: #{svgp_encoder_forward.1} parent=71 // pred_check
          %p586 = pneg %p585
        $region74: #{svgp_encoder_forward.1} parent=71 // pred_check_branch
          %588 = sbr.rel (%p586) target = $region76
        $region75: #{svgp_encoder_forward.1} parent=71 // pred_region
          %589 = vst [vmem:[#allocation4] sm:$0x1] 0.0
          %590 = vst [vmem:[#allocation5] sm:$0x1] 0.0
        $region76: #{svgp_encoder_forward.1} parent=71 // pred_fallthru
          _
        %v591 = vmul.f32 %v581, %v362
        %v592 = vmul.f32 %v583, %v363
        %v593 = vld [vmem:[#allocation4] sm:$0x1]
        %v594 = vadd.f32 %v591, %v592
        %v595 = vrot.slane %v594, 4
        %v596 = vadd.f32 %v594, %v595
        %v597 = vrot.slane %v596, 2
        %v598 = vadd.f32 %v596, %v597
        %v599 = vrot.slane %v598, 1
        %v600 = vadd.f32 %v598, %v599
        %v601 = vadd.f32 %v593, %v600
        %602 = vst [vmem:[#allocation4] sm:$0x1] %v601
        %v603 = vld [vmem:[#allocation5] sm:$0x1]
        %v604 = vmul.f32 %v591, %v581
        %v605 = vmul.f32 %v592, %v583
        %v606 = vadd.f32 %v604, %v605
        %v607 = vrot.slane %v606, 4
        %v608 = vadd.f32 %v606, %v607
        %v609 = vrot.slane %v608, 2
        %v610 = vadd.f32 %v608, %v609
        %v611 = vrot.slane %v610, 1
        %v612 = vadd.f32 %v610, %v611
        %v613 = vadd.f32 %v603, %v612
        %614 = vst [vmem:[#allocation5] sm:$0x1] %v613
        %p615 = scmp.eq.s32.totalorder %s25, 2
        // Predicated region
        $region77: #{svgp_encoder_forward.1} parent=71 // pred_check
          %p616 = pneg %p615
        $region78: #{svgp_encoder_forward.1} parent=71 // pred_check_branch
          %618 = sbr.rel (%p616) target = $region80
        $region79: #{svgp_encoder_forward.1} parent=71 // pred_region
          %v619 = vld [vmem:[#allocation4] sm:$0x1]
          %v620 = vmul.f32 %v619, 0.025
          %v621 = vld [vmem:[#allocation5] sm:$0x1]
          %v622 = vmul.f32 %v621, 0.025
          %v623 = vmul.f32 %v620, %v620
          %v624 = vsub.f32 %v622, %v623
          %v625 = vmax.f32 %v624, 0.0
          %626 = vst [vmem:[#allocation4] sm:$0x1] %v620
          %v627 = vld [vmem:[%s5] sm:$0x1]
          %v628 = vadd.f32 %v625, 1e-05
          %v629 = vrsqrt.pop %v628
          %v630 = vmul.f32 %v629, %v628
          %v631 = vmul.f32 %v630, %v629
          %v632 = vmul.f32 0.5, %v631
          %v633 = vsub.f32 1.5, %v632
          %v634 = vmul.f32 %v629, %v633
          %vm635 = vweird.f32 %v628
          %vm636 = vweird.f32 %v629
          %vm637 = vmor %vm635, %vm636
          %v638 = vsel %vm637, %v629, %v634
          %v639 = vmul.f32 %v627, %v638
          %640 = vst [vmem:[#allocation5] sm:$0x1] %v639
        $region80: #{svgp_encoder_forward.1} parent=71 // pred_fallthru
          _
      $region72: #{svgp_encoder_forward.1} parent=55 // pred_fallthru
        _
      %p641 = scmp.eq.s32.totalorder %s24, 2
      // Predicated region
      $region81: #{svgp_encoder_forward.1} parent=55 // pred_check
        %p642 = pneg %p641
      $region82: #{svgp_encoder_forward.1} parent=55 // pred_check_branch
        %644 = sbr.rel (%p642) target = $region84
      $region83: #{svgp_encoder_forward.1} parent=55 // pred_region
        %v645 = vpack.c.bf16 %v350, %v349
        %v646 = vld [vmem:[%s1] sm:$0xf]
        %v647 = vld [vmem:[%s1 + $0x4] sm:$0xf]
        %v650 = vunpack.c.l.b16 %v646
        %v651 = vunpack.c.l.b16 %v647
        %v652 = vpack.c.b16 %v651, %v650
        %vm654 = vcmask 130048
        %v656 = vsel %vm654, %v645, 0
        %658 = vmatpush.bf16.msra.mxu0 0
        %659 = vmatpush.bf16.msra.mxu0 0
        %660 = vmatpush.bf16.msra.mxu0 0
        %661 = vmatpush.bf16.msra.mxu0 0
        %662 = vmatpush.bf16.msra.mxu0 0
        %663 = vmatpush.bf16.msra.mxu0 0
        %664 = vmatpush.bf16.msra.mxu0 0
        %665 = vmatpush.bf16.msra.mxu0 %v652
        %666 = vmatmul.bf16.gmra.mxu0 %v656
        %v667 = vpop.f32.mrf.mxu0
        %v668 = vadd.f32 0.0, %v667
        %v669 = vpop.f32.mrf.mxu0
        %v670 = vadd.f32 0.0, %v669
        %671 = vdwg.mxu0
        %v672 = vld [vmem:[#allocation2] sm:$0x1]
        %v673 = vld [vmem:[#allocation3] sm:$0x1]
        %v675 = vperm.slane %v672, 0
        %v677 = vsub.f32 %v668, %v675
        %v678 = vsub.f32 %v670, %v675
        %v680 = vperm.slane %v673, 0
        %v682 = vmul.f32 %v677, %v680
        %v683 = vmul.f32 %v678, %v680
        %v684 = vld [vmem:[%s3] sm:$0x1]
        %v686 = vperm.slane %v684, 0
        %v688 = vadd.f32 %v682, %v686
        %v689 = vadd.f32 %v683, %v686
        %vm690 = vcmp.ge.f32.partialorder %v688, 0.0
        %vm691 = vcmp.ge.f32.partialorder %v689, 0.0
        %v692 = vmul.f32 %v688, 0.01
        %v693 = vmul.f32 %v689, 0.01
        %v694 = vsel %vm690, %v688, %v692
        %v695 = vsel %vm691, %v689, %v693
        %v696 = vpack.c.bf16 %v695, %v694
        %v697 = vld [vmem:[%s4] sm:$0xf]
        %v698 = vld [vmem:[%s4 + $0x4] sm:$0xf]
        %v699 = vld [vmem:[%s4 + $0x8] sm:$0xf]
        %v700 = vld [vmem:[%s4 + $0xc] sm:$0xf]
        %v701 = vld [vmem:[%s4 + $0x10] sm:$0xf]
        %v702 = vld [vmem:[%s4 + $0x14] sm:$0xf]
        %v703 = vld [vmem:[%s4 + $0x18] sm:$0xf]
        %v704 = vld [vmem:[%s4 + $0x1c] sm:$0xf]
        %v705 = vld [vmem:[%s4 + $0x20] sm:$0xf]
        %v706 = vld [vmem:[%s4 + $0x24] sm:$0xf]
        %v707 = vld [vmem:[%s4 + $0x28] sm:$0xf]
        %v708 = vld [vmem:[%s4 + $0x2c] sm:$0xf]
        %v709 = vld [vmem:[%s4 + $0x30] sm:$0xf]
        %v710 = vld [vmem:[%s4 + $0x34] sm:$0xf]
        %v711 = vld [vmem:[%s4 + $0x38] sm:$0xf]
        %v712 = vld [vmem:[%s4 + $0x3c] sm:$0xf]
        %v729 = vunpack.c.l.b16 %v697
        %v730 = vunpack.c.l.b16 %v698
        %v731 = vunpack.c.l.b16 %v699
        %v732 = vunpack.c.l.b16 %v700
        %v733 = vunpack.c.l.b16 %v701
        %v734 = vunpack.c.l.b16 %v702
        %v735 = vunpack.c.l.b16 %v703
        %v736 = vunpack.c.l.b16 %v704
        %v737 = vunpack.c.l.b16 %v705
        %v738 = vunpack.c.l.b16 %v706
        %v739 = vunpack.c.l.b16 %v707
        %v740 = vunpack.c.l.b16 %v708
        %v741 = vunpack.c.l.b16 %v709
        %v742 = vunpack.c.l.b16 %v710
        %v743 = vunpack.c.l.b16 %v711
        %v744 = vunpack.c.l.b16 %v712
        %v745 = vpack.c.b16 %v730, %v729
        %v746 = vpack.c.b16 %v732, %v731
        %v747 = vpack.c.b16 %v734, %v733
        %v748 = vpack.c.b16 %v736, %v735
        %v749 = vpack.c.b16 %v738, %v737
        %v750 = vpack.c.b16 %v740, %v739
        %v751 = vpack.c.b16 %v742, %v741
        %v752 = vpack.c.b16 %v744, %v743
        %761 = vmatpush.bf16.msra.mxu0 %v752
        %762 = vmatpush.bf16.msra.mxu0 %v751
        %763 = vmatpush.bf16.msra.mxu0 %v750
        %764 = vmatpush.bf16.msra.mxu0 %v749
        %765 = vmatpush.bf16.msra.mxu0 %v748
        %766 = vmatpush.bf16.msra.mxu0 %v747
        %767 = vmatpush.bf16.msra.mxu0 %v746
        %768 = vmatpush.bf16.msra.mxu0 %v745
        %769 = vmatmul.bf16.gmra.mxu0 %v696
        %v770 = vpop.f32.mrf.mxu0
        %v771 = vadd.f32 0.0, %v770
        %v772 = vpop.f32.mrf.mxu0
        %v773 = vadd.f32 0.0, %v772
        %774 = vdwg.mxu0
        %v775 = vld [vmem:[#allocation4] sm:$0x1]
        %v776 = vld [vmem:[#allocation5] sm:$0x1]
        %v778 = vperm.slane %v775, 0
        %v780 = vsub.f32 %v771, %v778
        %v781 = vsub.f32 %v773, %v778
        %v783 = vperm.slane %v776, 0
        %v785 = vmul.f32 %v780, %v783
        %v786 = vmul.f32 %v781, %v783
        %v787 = vld [vmem:[%s6] sm:$0x1]
        %v789 = vperm.slane %v787, 0
        %v791 = vadd.f32 %v785, %v789
        %v792 = vadd.f32 %v786, %v789
        %vm793 = vcmp.ge.f32.partialorder %v791, 0.0
        %vm794 = vcmp.ge.f32.partialorder %v792, 0.0
        %v795 = vmul.f32 %v791, 0.01
        %v796 = vmul.f32 %v792, 0.01
        %v797 = vsel %vm793, %v791, %v795
        %v798 = vsel %vm794, %v792, %v796
        %v799 = vpack.c.bf16 %v798, %v797
        %v800 = vld [vmem:[%s7] sm:$0xf]
        %v801 = vld [vmem:[%s7 + $0x4] sm:$0xf]
        %v802 = vld [vmem:[%s7 + $0x8] sm:$0xf]
        %v803 = vld [vmem:[%s7 + $0xc] sm:$0xf]
        %v804 = vld [vmem:[%s7 + $0x10] sm:$0xf]
        %v805 = vld [vmem:[%s7 + $0x14] sm:$0xf]
        %v806 = vld [vmem:[%s7 + $0x18] sm:$0xf]
        %v807 = vld [vmem:[%s7 + $0x1c] sm:$0xf]
        %v808 = vld [vmem:[%s7 + $0x20] sm:$0xf]
        %v809 = vld [vmem:[%s7 + $0x24] sm:$0xf]
        %v810 = vld [vmem:[%s7 + $0x28] sm:$0xf]
        %v811 = vld [vmem:[%s7 + $0x2c] sm:$0xf]
        %v812 = vld [vmem:[%s7 + $0x30] sm:$0xf]
        %v813 = vld [vmem:[%s7 + $0x34] sm:$0xf]
        %v814 = vld [vmem:[%s7 + $0x38] sm:$0xf]
        %v815 = vld [vmem:[%s7 + $0x3c] sm:$0xf]
        %v816 = vld [vmem:[%s8] sm:$0x1]
        %v818 = vperm.slane %v816, 0
        %v836 = vunpack.c.l.b16 %v800
        %v837 = vunpack.c.l.b16 %v801
        %v838 = vunpack.c.l.b16 %v802
        %v839 = vunpack.c.l.b16 %v803
        %v840 = vunpack.c.l.b16 %v804
        %v841 = vunpack.c.l.b16 %v805
        %v842 = vunpack.c.l.b16 %v806
        %v843 = vunpack.c.l.b16 %v807
        %v844 = vunpack.c.l.b16 %v808
        %v845 = vunpack.c.l.b16 %v809
        %v846 = vunpack.c.l.b16 %v810
        %v847 = vunpack.c.l.b16 %v811
        %v848 = vunpack.c.l.b16 %v812
        %v849 = vunpack.c.l.b16 %v813
        %v850 = vunpack.c.l.b16 %v814
        %v851 = vunpack.c.l.b16 %v815
        %v852 = vpack.c.b16 %v837, %v836
        %v853 = vpack.c.b16 %v839, %v838
        %v854 = vpack.c.b16 %v841, %v840
        %v855 = vpack.c.b16 %v843, %v842
        %v856 = vpack.c.b16 %v845, %v844
        %v857 = vpack.c.b16 %v847, %v846
        %v858 = vpack.c.b16 %v849, %v848
        %v859 = vpack.c.b16 %v851, %v850
        %868 = vmatpush.bf16.msra.mxu0 %v859
        %869 = vmatpush.bf16.msra.mxu0 %v858
        %870 = vmatpush.bf16.msra.mxu0 %v857
        %871 = vmatpush.bf16.msra.mxu0 %v856
        %872 = vmatpush.bf16.msra.mxu0 %v855
        %873 = vmatpush.bf16.msra.mxu0 %v854
        %874 = vmatpush.bf16.msra.mxu0 %v853
        %875 = vmatpush.bf16.msra.mxu0 %v852
        %876 = vmatmul.bf16.gmra.mxu0 %v799
        %v877 = vpop.f32.mrf.mxu0
        %v878 = vadd.f32 %v818, %v877
        %v879 = vpop.f32.mrf.mxu0
        %v880 = vadd.f32 %v818, %v879
        %881 = vdwg.mxu0
        %v882 = vlaneseq
        %v883 = vand.u32 %v882, 127
        %vm884 = vcmp.ge.s32.totalorder %v883, 4
        %vm885 = vcmp.lt.s32.totalorder %v883, 8
        %vm886 = vmand %vm884, %vm885
        %v887 = vmul.f32 %v878, 1.442695
        %v888 = vpow.pop %v887
        %v889 = vmul.f32 %v880, 1.442695
        %v890 = vpow.pop %v889
        %v891 = vsel %vm886, %v888, %v878
        %v892 = vsel %vm886, %v890, %v880
        %893 = vst [vmem:[%s346] sm:$0xff] %v891
        %894 = vst [vmem:[%s346 + $0x8] sm:$0xff] %v892
      $region84: #{svgp_encoder_forward.1} parent=55 // pred_fallthru
        _
      %s895 = smul.u32 2, %s25
      %p896 = scmp.lt.s32.totalorder %s895, 5
      %s897 = scalar_select %p896, %s895, 5
      %s898 = smul.addr %s897, 8
      %s899 = scalar_lea.vmem %s9, %s898
      // Predicated region
      $region85: #{svgp_encoder_forward.1} parent=55 // pred_check
        %p900 = pneg %p244
      $region86: #{svgp_encoder_forward.1} parent=55 // pred_check_branch
        %902 = sbr.rel (%p900) target = $region88
      $region87: #{svgp_encoder_forward.1} parent=55 // pred_region
        %s903 = smul.u32 2, %s25
      $region88: #{svgp_encoder_forward.1} parent=55 // pred_fallthru
        _
    $region56: #{svgp_encoder_forward.1} parent=5 // pred_fallthru
      _
    %p904 = scmp.le.s32.totalorder 2, %s15
    // Predicated region
    $region89: #{svgp_encoder_forward.1} parent=5 // pred_check
      %p905 = pneg %p904
    $region90: #{svgp_encoder_forward.1} parent=5 // pred_check_branch
      %907 = sbr.rel (%p905) target = $region92
    $region91: #{svgp_encoder_forward.1} parent=5 // pred_region
      %s908 = ssub.s32 %s15, 2
      // Predicated region
      $region93: #{svgp_encoder_forward.1} parent=91 // pred_check
        %p909 = pneg %p250
      $region94: #{svgp_encoder_forward.1} parent=91 // pred_check_branch
        %911 = sbr.rel (%p909) target = $region96
      $region95: #{svgp_encoder_forward.1} parent=91 // pred_region
        %s912 = smul.u32 2, %s27
        %p913 = scmp.lt.s32.totalorder %s912, 5
        %s914 = scalar_select %p913, %s912, 5
        %s915 = smul.addr %s914, 8
        %s916 = scalar_lea.vmem %s9, %s915
      $region96: #{svgp_encoder_forward.1} parent=91 // pred_fallthru
        _
    $region92: #{svgp_encoder_forward.1} parent=5 // pred_fallthru
      _
  $region6: #{svgp_encoder_forward.1} parent=0 // loop_footer
    %s19 = sadd.s32 1, %s15
  $region7: #{svgp_encoder_forward.1} parent=0 // loop_footer_branch
    %14 = sbr.rel target = $region3
  $region8: #{svgp_encoder_forward.1} parent=0 // loop_exit
    _

</llo_original>
